<compile_context>
chip_gen: v6e
topology: v6e:2x2x1
jax: 0.10.0
libtpu: 0.0.40
codegen_flags: <defaults>
</compile_context>

<pallas_src>
import functools

import jax
import jax.numpy as jnp
from jax.experimental import pallas as pl
from jax.experimental.pallas import tpu as pltpu


_BLOCK_BUDGET_BYTES = 2 * 1024 * 1024  # target native bytes per input block


def _round_up(n, m):
    return ((n + m - 1) // m) * m


def _choose_tiling(n, cap, align):
    """Return (n_padded, tile) with tile | n_padded and tile <= cap.

    tile is either the full (unpadded) dim or a multiple of `align`, so the
    BlockSpec (8, 128) rule is always satisfied.  `cap` must be a multiple of
    `align`.
    """
    if n <= cap:
        return n, n                      # single block spans the full dim
    n_pad = _round_up(n, align)
    best = 0
    t = align
    while t <= cap:
        if n_pad % t == 0:
            best = t
        t += align
    if best >= min(cap, 4 * align):      # decent tile with minimal padding
        return n_pad, best
    return _round_up(n, cap), cap        # fall back: pad up to a cap multiple


# ----------------------------------------------------------------------------
# 3D path: rows = B*D, reduce over the last (lane) axis T, T tiled on the grid.
# ----------------------------------------------------------------------------
def _mean_std_lane_kernel(t_real, x_ref, out_ref, sum_ref, sq_ref):
    # x_ref: (tile_r, tile_t); out_ref: (tile_r, 2); scratch: (tile_r, 1) f32.
    k = pl.program_id(1)

    @pl.when(k == 0)
    def _():
        sum_ref[...] = jnp.zeros_like(sum_ref)
        sq_ref[...] = jnp.zeros_like(sq_ref)

    x = x_ref[...].astype(jnp.float32)                     # per-tile upcast
    sum_ref[...] += jnp.sum(x, axis=-1, keepdims=True)
    sq_ref[...] += jnp.sum(x * x, axis=-1, keepdims=True)

    @pl.when(k == pl.num_programs(1) - 1)
    def _():
        s = sum_ref[...]
        mean = s * (1.0 / t_real)
        var = jnp.maximum(sq_ref[...] - s * mean, 0.0) / (t_real - 1)
        std = jnp.sqrt(var)
        out_ref[:, 0:1] = mean.astype(out_ref.dtype)
        out_ref[:, 1:2] = std.astype(out_ref.dtype)


def _mean_std_pooling_3d(x):
    B, D, T = x.shape
    R = B * D
    x2 = x.reshape(R, T)

    R_pad, tile_r = _choose_tiling(R, 256, 8)
    T_pad, tile_t = _choose_tiling(T, 1024, 128)
    if (R_pad, T_pad) != (R, T):
        # Zero padding is harmless: padded T columns add 0 to sum/sumsq (we
        # divide by the real T), padded rows are sliced off below.
        x2 = jnp.pad(x2, ((0, R_pad - R), (0, T_pad - T)))

    grid = (R_pad // tile_r, T_pad // tile_t)
    out = pl.pallas_call(
        functools.partial(_mean_std_lane_kernel, T),
        out_shape=jax.ShapeDtypeStruct((R_pad, 2), x.dtype),
        grid=grid,
        in_specs=[pl.BlockSpec((tile_r, tile_t), lambda i, k: (i, k))],
        out_specs=pl.BlockSpec((tile_r, 2), lambda i, k: (i, 0)),
        scratch_shapes=[
            pltpu.VMEM((tile_r, 1), jnp.float32),
            pltpu.VMEM((tile_r, 1), jnp.float32),
        ],
        compiler_params=pltpu.CompilerParams(
            dimension_semantics=("parallel", "arbitrary")
        ),
    )(x2)

    mean = out[:R, 0].reshape(B, D)
    std = out[:R, 1].reshape(B, D)
    return jnp.concatenate([mean, std], axis=1)


# ----------------------------------------------------------------------------
# 4D path: no wrapper transpose.  View x as [B*C, F, T] and reduce over the
# sublane axis F inside the kernel; rows (B*C) and T are tiled on the grid.
# ----------------------------------------------------------------------------
def _mean_std_sublane_kernel(f_real, x_ref, out_ref):
    # x_ref: (tile_bc, F, tile_t); out_ref: (2, tile_bc, tile_t)
    x = x_ref[...].astype(jnp.float32)
    s = jnp.sum(x, axis=1)                                 # (tile_bc, tile_t)
    sq = jnp.sum(x * x, axis=1)
    mean = s * (1.0 / f_real)
    var = jnp.maximum(sq - s * mean, 0.0) / (f_real - 1)
    std = jnp.sqrt(var)
    out_ref[0] = mean.astype(out_ref.dtype)
    out_ref[1] = std.astype(out_ref.dtype)


def _mean_std_pooling_4d(x):
    B, C, F, T = x.shape
    itemsize = jnp.dtype(x.dtype).itemsize

    # If F is so large that even a (1, F, 128) block blows the budget, fall back
    # to the transposed lane-reduction path (which tiles the reduced axis).
    if F * 128 * itemsize > _BLOCK_BUDGET_BYTES:
        xt = jnp.transpose(x, (0, 1, 3, 2)).reshape(B, C * T, F)
        return _mean_std_pooling_3d(xt)

    BC = B * C
    xr = x.reshape(BC, F, T)                               # free reshape

    cap_t = max(128, min(512, (_BLOCK_BUDGET_BYTES // (F * itemsize)) // 128 * 128))
    T_pad, tile_t = _choose_tiling(T, cap_t, 128)

    max_rows = max(1, _BLOCK_BUDGET_BYTES // (F * tile_t * itemsize))
    if BC <= max_rows:
        tile_bc, BC_pad = BC, BC
    else:
        tile_bc = max(8, (max_rows // 8) * 8)              # output sublane dim
        BC_pad = _round_up(BC, tile_bc)

    if (BC_pad, T_pad) != (BC, T):
        xr = jnp.pad(xr, ((0, BC_pad - BC), (0, 0), (0, T_pad - T)))

    grid = (BC_pad // tile_bc, T_pad // tile_t)
    out = pl.pallas_call(
        functools.partial(_mean_std_sublane_kernel, F),
        out_shape=jax.ShapeDtypeStruct((2, BC_pad, T_pad), x.dtype),
        grid=grid,
        in_specs=[pl.BlockSpec((tile_bc, F, tile_t), lambda i, j: (i, 0, j))],
        out_specs=pl.BlockSpec((2, tile_bc, tile_t), lambda i, j: (0, i, j)),
        compiler_params=pltpu.CompilerParams(
            dimension_semantics=("parallel", "parallel")
        ),
    )(xr)

    mean = out[0, :BC, :T].reshape(B, C * T)
    std = out[1, :BC, :T].reshape(B, C * T)
    return jnp.concatenate([mean, std], axis=1)


def mean_std_pooling(x):
    """Pallas implementation of sidekit MeanStdPooling.forward.

    x: [B, D, T] -> [B, 2*D]   (mean/std over T)
    x: [B, C, F, T] -> [B, 2*C*T] (torch permute+flatten then mean/std over F)
    """
    if x.ndim == 4:
        return _mean_std_pooling_4d(x)
    return _mean_std_pooling_3d(x)


def _reference(x):
    # Pure-JAX reference mirroring the torch module.
    if x.ndim == 4:
        b, c, f, t = x.shape
        x = jnp.transpose(x, (0, 1, 3, 2)).reshape(b, c * t, f)
    mean = jnp.mean(x, axis=2)
    std = jnp.std(x, axis=2, ddof=1)  # torch.std is unbiased by default
    return jnp.concatenate([mean, std], axis=1)


if __name__ == "__main__":
    key = jax.random.PRNGKey(0)
    # Module has no parameters (its __init__ is a no-op).
    B, C, F, T = 2, 4, 16, 16
    k1, k2 = jax.random.split(key)
    x3 = jax.random.normal(k1, (B, C * F, T), dtype=jnp.float32)   # [B, C*F, T]
    x4 = jax.random.normal(k2, (B, C, F, T), dtype=jnp.float32)    # [B, C, F, T]

    out3 = jax.block_until_ready(mean_std_pooling(x3))
    out4 = jax.block_until_ready(mean_std_pooling(x4))

    ref3 = _reference(x3)
    ref4 = _reference(x4)

    assert out3.shape == (B, 2 * C * F), out3.shape
    assert out4.shape == (B, 2 * C * T), out4.shape
    assert jnp.allclose(out3, ref3, atol=1e-5, rtol=1e-5)
    assert jnp.allclose(out4, ref4, atol=1e-5, rtol=1e-5)

    print("KERNEL_OK")
</pallas_src>

<mosaic_0001>
module attributes {stable_mosaic.version = 11 : i64} {
  func.func @_mean_std_lane_kernel(%arg0: i32, %arg1: i32, %arg2: memref<128x16xf32, #tpu.memory_space<vmem>>, %arg3: memref<128x2xf32, #tpu.memory_space<vmem>>, %arg4: memref<128x1xf32, #tpu.memory_space<vmem>>, %arg5: memref<128x1xf32, #tpu.memory_space<vmem>>) attributes {dimension_semantics = [#tpu.dimension_semantics<parallel>, #tpu.dimension_semantics<arbitrary>], iteration_bounds = array<i64: 1, 1>, scalar_prefetch = 0 : i64, scratch_operands = 2 : i64, tpu.core_type = #tpu.core_type<tc>, window_params = [{transform_indices = @transform_0, window_bounds = array<i64: 128, 16>}, {transform_indices = @transform_1, window_bounds = array<i64: 128, 2>}]} {
    %c0_i32 = arith.constant 0 : i32
    %0 = arith.cmpi eq, %arg1, %c0_i32 : i32
    %1 = arith.extui %0 : i1 to i32
    %c0_i32_0 = arith.constant 0 : i32
    %2 = arith.cmpi ne, %1, %c0_i32_0 : i32
    scf.if %2 {
      %cst_13 = arith.constant 0.000000e+00 : f32
      %18 = vector.broadcast %cst_13 : f32 to vector<128x1xf32>
      %c0_14 = arith.constant 0 : index
      %c0_15 = arith.constant 0 : index
      %19 = vector.load %arg4[%c0_14, %c0_15] : memref<128x1xf32, #tpu.memory_space<vmem>>, vector<128x1xf32>
      tpu.vector_store %arg4[%c0_14, %c0_15], %18 {strides = array<i32>} : memref<128x1xf32, #tpu.memory_space<vmem>>, vector<128x1xf32>,
      %cst_16 = arith.constant 0.000000e+00 : f32
      %20 = vector.broadcast %cst_16 : f32 to vector<128x1xf32>
      %c0_17 = arith.constant 0 : index
      %c0_18 = arith.constant 0 : index
      %21 = vector.load %arg5[%c0_17, %c0_18] : memref<128x1xf32, #tpu.memory_space<vmem>>, vector<128x1xf32>
      tpu.vector_store %arg5[%c0_17, %c0_18], %20 {strides = array<i32>} : memref<128x1xf32, #tpu.memory_space<vmem>>, vector<128x1xf32>,
    } else {
    }
    %c0 = arith.constant 0 : index
    %c0_1 = arith.constant 0 : index
    %3 = vector.load %arg2[%c0, %c0_1] : memref<128x16xf32, #tpu.memory_space<vmem>>, vector<128x16xf32>
    %c0_2 = arith.constant 0 : index
    %c0_3 = arith.constant 0 : index
    %4 = vector.load %arg4[%c0_2, %c0_3] : memref<128x1xf32, #tpu.memory_space<vmem>>, vector<128x1xf32>
    %cst = arith.constant dense<0.000000e+00> : vector<128xf32>
    %5 = vector.multi_reduction <add>, %3, %cst [1] : vector<128x16xf32> to vector<128xf32>
    %6 = vector.shape_cast %5 : vector<128xf32> to vector<128x1xf32>
    %7 = arith.addf %4, %6 : vector<128x1xf32>
    %c0_4 = arith.constant 0 : index
    %c0_5 = arith.constant 0 : index
    %8 = vector.load %arg4[%c0_4, %c0_5] : memref<128x1xf32, #tpu.memory_space<vmem>>, vector<128x1xf32>
    tpu.vector_store %arg4[%c0_4, %c0_5], %7 {strides = array<i32>} : memref<128x1xf32, #tpu.memory_space<vmem>>, vector<128x1xf32>,
    %c0_6 = arith.constant 0 : index
    %c0_7 = arith.constant 0 : index
    %9 = vector.load %arg5[%c0_6, %c0_7] : memref<128x1xf32, #tpu.memory_space<vmem>>, vector<128x1xf32>
    %10 = arith.mulf %3, %3 : vector<128x16xf32>
    %cst_8 = arith.constant dense<0.000000e+00> : vector<128xf32>
    %11 = vector.multi_reduction <add>, %10, %cst_8 [1] : vector<128x16xf32> to vector<128xf32>
    %12 = vector.shape_cast %11 : vector<128xf32> to vector<128x1xf32>
    %13 = arith.addf %9, %12 : vector<128x1xf32>
    %c0_9 = arith.constant 0 : index
    %c0_10 = arith.constant 0 : index
    %14 = vector.load %arg5[%c0_9, %c0_10] : memref<128x1xf32, #tpu.memory_space<vmem>>, vector<128x1xf32>
    tpu.vector_store %arg5[%c0_9, %c0_10], %13 {strides = array<i32>} : memref<128x1xf32, #tpu.memory_space<vmem>>, vector<128x1xf32>,
    %c0_i32_11 = arith.constant 0 : i32
    %15 = arith.cmpi eq, %arg1, %c0_i32_11 : i32
    %16 = arith.extui %15 : i1 to i32
    %c0_i32_12 = arith.constant 0 : i32
    %17 = arith.cmpi ne, %16, %c0_i32_12 : i32
    scf.if %17 {
      %c0_13 = arith.constant 0 : index
      %c0_14 = arith.constant 0 : index
      %18 = vector.load %arg4[%c0_13, %c0_14] : memref<128x1xf32, #tpu.memory_space<vmem>>, vector<128x1xf32>
      %cst_15 = arith.constant 6.250000e-02 : f32
      %19 = vector.broadcast %cst_15 : f32 to vector<128x1xf32>
      %20 = arith.mulf %18, %19 : vector<128x1xf32>
      %c0_16 = arith.constant 0 : index
      %c0_17 = arith.constant 0 : index
      %21 = vector.load %arg5[%c0_16, %c0_17] : memref<128x1xf32, #tpu.memory_space<vmem>>, vector<128x1xf32>
      %22 = arith.mulf %18, %20 : vector<128x1xf32>
      %23 = arith.subf %21, %22 : vector<128x1xf32>
      %cst_18 = arith.constant 0.000000e+00 : f32
      %24 = vector.broadcast %cst_18 : f32 to vector<128x1xf32>
      %25 = arith.maximumf %23, %24 : vector<128x1xf32>
      %cst_19 = arith.constant 1.500000e+01 : f32
      %26 = vector.broadcast %cst_19 : f32 to vector<128x1xf32>
      %27 = arith.divf %25, %26 : vector<128x1xf32>
      %28 = math.sqrt %27 : vector<128x1xf32>
      %c0_20 = arith.constant 0 : index
      %c0_21 = arith.constant 0 : index
      %29 = vector.load %arg3[%c0_20, %c0_21] : memref<128x2xf32, #tpu.memory_space<vmem>>, vector<128x1xf32>
      tpu.vector_store %arg3[%c0_20, %c0_21], %20 {strides = array<i32>} : memref<128x2xf32, #tpu.memory_space<vmem>>, vector<128x1xf32>,
      %c0_22 = arith.constant 0 : index
      %c1 = arith.constant 1 : index
      %30 = vector.load %arg3[%c0_22, %c1] : memref<128x2xf32, #tpu.memory_space<vmem>>, vector<128x1xf32>
      tpu.vector_store %arg3[%c0_22, %c1], %28 {strides = array<i32>} : memref<128x2xf32, #tpu.memory_space<vmem>>, vector<128x1xf32>,
    } else {
    }
    return
  }
  func.func @transform_0(%arg0: i32, %arg1: i32) -> (i32, i32) {
    %c0_i32 = arith.constant 0 : i32
    return %arg0, %arg1 : i32, i32
  }
  func.func @transform_1(%arg0: i32, %arg1: i32) -> (i32, i32) {
    %c0_i32 = arith.constant 0 : i32
    %c0_i32_0 = arith.constant 0 : i32
    return %arg0, %c0_i32 : i32, i32
  }
}

</mosaic_0001>

<llo_original>
// kernel: tpu_custom_call.1
$region0: #{tpu_custom_call.1}
  #allocation0 [shape = 'u32[]', space=smem, size = 0x4, offset = 0x4, fixed_abs, tag = 'smem constant byte address 0x4 - core index']
  #allocation1 [shape = 'u32[144,128]{1,0:T(1,128)}', space=vmem, size = 0x12000, scoped, tag = 'internal scratch']
  #allocation2 [shape = 'f32[128,1]{1,0:T(8,128)}', space=vmem, size = 0x10000, scoped, tag = 'scratch operand']
  #allocation3 [shape = 'f32[128,1]{1,0:T(8,128)}', space=vmem, size = 0x10000, scoped, tag = 'scratch operand']
  %s0 = inlined_call_operand.vmem [shape: f32[128,16], index: 0, kind: input, shape index: {}]
  %s1 = inlined_call_operand.vmem [shape: f32[128,2], index: 1, kind: output, shape index: {}]
  %s2 = sld [smem:[#allocation0]]
  $region22: #{tpu_custom_call.1} parent=0
    _
  %s4 = ssub.s32 1, %s2
  %s5 = scalar_select 0, %s4, %s2
  // Predicated region
  $region2: #{tpu_custom_call.1} parent=0 // pred_check
    _
  $region3: #{tpu_custom_call.1} parent=0 // pred_check_branch
    %7 = sbr.rel (0) target = $region5
  $region4: #{tpu_custom_call.1} parent=0 // pred_region
    _
  $region5: #{tpu_custom_call.1} parent=0 // pred_fallthru
    _
  %p8 = scmp.eq.s32.totalorder 0, 0
  // Predicated region
  $region6: #{tpu_custom_call.1} parent=0 // pred_check
    %p9 = pneg %p8
  $region7: #{tpu_custom_call.1} parent=0 // pred_check_branch
    %11 = sbr.rel (%p9) target = $region9
  $region8: #{tpu_custom_call.1} parent=0 // pred_region
    %vm12 = vcmask 7168
    %13 = vst.msk [vmem:[#allocation2] sm:$0xff] %vm12, 0.0
    %14 = vst.msk [vmem:[#allocation2 + $0x8] sm:$0xff] %vm12, 0.0
    %15 = vst.msk [vmem:[#allocation2 + $0x10] sm:$0xff] %vm12, 0.0
    %16 = vst.msk [vmem:[#allocation2 + $0x18] sm:$0xff] %vm12, 0.0
    %17 = vst.msk [vmem:[#allocation2 + $0x20] sm:$0xff] %vm12, 0.0
    %18 = vst.msk [vmem:[#allocation2 + $0x28] sm:$0xff] %vm12, 0.0
    %19 = vst.msk [vmem:[#allocation2 + $0x30] sm:$0xff] %vm12, 0.0
    %20 = vst.msk [vmem:[#allocation2 + $0x38] sm:$0xff] %vm12, 0.0
    %21 = vst.msk [vmem:[#allocation2 + $0x40] sm:$0xff] %vm12, 0.0
    %22 = vst.msk [vmem:[#allocation2 + $0x48] sm:$0xff] %vm12, 0.0
    %23 = vst.msk [vmem:[#allocation2 + $0x50] sm:$0xff] %vm12, 0.0
    %24 = vst.msk [vmem:[#allocation2 + $0x58] sm:$0xff] %vm12, 0.0
    %25 = vst.msk [vmem:[#allocation2 + $0x60] sm:$0xff] %vm12, 0.0
    %26 = vst.msk [vmem:[#allocation2 + $0x68] sm:$0xff] %vm12, 0.0
    %27 = vst.msk [vmem:[#allocation2 + $0x70] sm:$0xff] %vm12, 0.0
    %28 = vst.msk [vmem:[#allocation2 + $0x78] sm:$0xff] %vm12, 0.0
    %29 = vst.msk [vmem:[#allocation3] sm:$0xff] %vm12, 0.0
    %30 = vst.msk [vmem:[#allocation3 + $0x8] sm:$0xff] %vm12, 0.0
    %31 = vst.msk [vmem:[#allocation3 + $0x10] sm:$0xff] %vm12, 0.0
    %32 = vst.msk [vmem:[#allocation3 + $0x18] sm:$0xff] %vm12, 0.0
    %33 = vst.msk [vmem:[#allocation3 + $0x20] sm:$0xff] %vm12, 0.0
    %34 = vst.msk [vmem:[#allocation3 + $0x28] sm:$0xff] %vm12, 0.0
    %35 = vst.msk [vmem:[#allocation3 + $0x30] sm:$0xff] %vm12, 0.0
    %36 = vst.msk [vmem:[#allocation3 + $0x38] sm:$0xff] %vm12, 0.0
    %37 = vst.msk [vmem:[#allocation3 + $0x40] sm:$0xff] %vm12, 0.0
    %38 = vst.msk [vmem:[#allocation3 + $0x48] sm:$0xff] %vm12, 0.0
    %39 = vst.msk [vmem:[#allocation3 + $0x50] sm:$0xff] %vm12, 0.0
    %40 = vst.msk [vmem:[#allocation3 + $0x58] sm:$0xff] %vm12, 0.0
    %41 = vst.msk [vmem:[#allocation3 + $0x60] sm:$0xff] %vm12, 0.0
    %42 = vst.msk [vmem:[#allocation3 + $0x68] sm:$0xff] %vm12, 0.0
    %43 = vst.msk [vmem:[#allocation3 + $0x70] sm:$0xff] %vm12, 0.0
    %44 = vst.msk [vmem:[#allocation3 + $0x78] sm:$0xff] %vm12, 0.0
  $region9: #{tpu_custom_call.1} parent=0 // pred_fallthru
    _
  %v45 = vld [vmem:[%s0] sm:$0xff]
  %v46 = vld [vmem:[%s0 + $0x8] sm:$0xff]
  %v47 = vld [vmem:[%s0 + $0x10] sm:$0xff]
  %v48 = vld [vmem:[%s0 + $0x18] sm:$0xff]
  %v49 = vld [vmem:[%s0 + $0x20] sm:$0xff]
  %v50 = vld [vmem:[%s0 + $0x28] sm:$0xff]
  %v51 = vld [vmem:[%s0 + $0x30] sm:$0xff]
  %v52 = vld [vmem:[%s0 + $0x38] sm:$0xff]
  %v53 = vld [vmem:[%s0 + $0x40] sm:$0xff]
  %v54 = vld [vmem:[%s0 + $0x48] sm:$0xff]
  %v55 = vld [vmem:[%s0 + $0x50] sm:$0xff]
  %v56 = vld [vmem:[%s0 + $0x58] sm:$0xff]
  %v57 = vld [vmem:[%s0 + $0x60] sm:$0xff]
  %v58 = vld [vmem:[%s0 + $0x68] sm:$0xff]
  %v59 = vld [vmem:[%s0 + $0x70] sm:$0xff]
  %v60 = vld [vmem:[%s0 + $0x78] sm:$0xff]
  %v61 = vld [vmem:[#allocation2] sm:$0xff]
  %v62 = vld [vmem:[#allocation2 + $0x8] sm:$0xff]
  %v63 = vld [vmem:[#allocation2 + $0x10] sm:$0xff]
  %v64 = vld [vmem:[#allocation2 + $0x18] sm:$0xff]
  %v65 = vld [vmem:[#allocation2 + $0x20] sm:$0xff]
  %v66 = vld [vmem:[#allocation2 + $0x28] sm:$0xff]
  %v67 = vld [vmem:[#allocation2 + $0x30] sm:$0xff]
  %v68 = vld [vmem:[#allocation2 + $0x38] sm:$0xff]
  %v69 = vld [vmem:[#allocation2 + $0x40] sm:$0xff]
  %v70 = vld [vmem:[#allocation2 + $0x48] sm:$0xff]
  %v71 = vld [vmem:[#allocation2 + $0x50] sm:$0xff]
  %v72 = vld [vmem:[#allocation2 + $0x58] sm:$0xff]
  %v73 = vld [vmem:[#allocation2 + $0x60] sm:$0xff]
  %v74 = vld [vmem:[#allocation2 + $0x68] sm:$0xff]
  %v75 = vld [vmem:[#allocation2 + $0x70] sm:$0xff]
  %v76 = vld [vmem:[#allocation2 + $0x78] sm:$0xff]
  %vm77 = vcmask 130048
  %v78 = vsel %vm77, %v45, 0.0
  %79 = vadd.xlane.f32.xlu0 %v78
  %v80 = vpop.xlane.xlu0 %79
  %v81 = vsel %vm77, %v46, 0.0
  %82 = vadd.xlane.f32.xlu0 %v81
  %v83 = vpop.xlane.xlu0 %82
  %v84 = vsel %vm77, %v47, 0.0
  %85 = vadd.xlane.f32.xlu0 %v84
  %v86 = vpop.xlane.xlu0 %85
  %v87 = vsel %vm77, %v48, 0.0
  %88 = vadd.xlane.f32.xlu0 %v87
  %v89 = vpop.xlane.xlu0 %88
  %v90 = vsel %vm77, %v49, 0.0
  %91 = vadd.xlane.f32.xlu0 %v90
  %v92 = vpop.xlane.xlu0 %91
  %v93 = vsel %vm77, %v50, 0.0
  %94 = vadd.xlane.f32.xlu0 %v93
  %v95 = vpop.xlane.xlu0 %94
  %v96 = vsel %vm77, %v51, 0.0
  %97 = vadd.xlane.f32.xlu0 %v96
  %v98 = vpop.xlane.xlu0 %97
  %v99 = vsel %vm77, %v52, 0.0
  %100 = vadd.xlane.f32.xlu0 %v99
  %v101 = vpop.xlane.xlu0 %100
  %v102 = vsel %vm77, %v53, 0.0
  %103 = vadd.xlane.f32.xlu0 %v102
  %v104 = vpop.xlane.xlu0 %103
  %v105 = vsel %vm77, %v54, 0.0
  %106 = vadd.xlane.f32.xlu0 %v105
  %v107 = vpop.xlane.xlu0 %106
  %v108 = vsel %vm77, %v55, 0.0
  %109 = vadd.xlane.f32.xlu0 %v108
  %v110 = vpop.xlane.xlu0 %109
  %v111 = vsel %vm77, %v56, 0.0
  %112 = vadd.xlane.f32.xlu0 %v111
  %v113 = vpop.xlane.xlu0 %112
  %v114 = vsel %vm77, %v57, 0.0
  %115 = vadd.xlane.f32.xlu0 %v114
  %v116 = vpop.xlane.xlu0 %115
  %v117 = vsel %vm77, %v58, 0.0
  %118 = vadd.xlane.f32.xlu0 %v117
  %v119 = vpop.xlane.xlu0 %118
  %v120 = vsel %vm77, %v59, 0.0
  %121 = vadd.xlane.f32.xlu0 %v120
  %v122 = vpop.xlane.xlu0 %121
  %v123 = vsel %vm77, %v60, 0.0
  %124 = vadd.xlane.f32.xlu0 %v123
  %v125 = vpop.xlane.xlu0 %124
  %v126 = vadd.f32 %v61, %v80
  %v127 = vadd.f32 %v62, %v83
  %v128 = vadd.f32 %v63, %v86
  %v129 = vadd.f32 %v64, %v89
  %v130 = vadd.f32 %v65, %v92
  %v131 = vadd.f32 %v66, %v95
  %v132 = vadd.f32 %v67, %v98
  %v133 = vadd.f32 %v68, %v101
  %v134 = vadd.f32 %v69, %v104
  %v135 = vadd.f32 %v70, %v107
  %v136 = vadd.f32 %v71, %v110
  %v137 = vadd.f32 %v72, %v113
  %v138 = vadd.f32 %v73, %v116
  %v139 = vadd.f32 %v74, %v119
  %v140 = vadd.f32 %v75, %v122
  %v141 = vadd.f32 %v76, %v125
  %vm142 = vcmask 7168
  %143 = vst.msk [vmem:[#allocation2] sm:$0xff] %vm142, %v126
  %144 = vst.msk [vmem:[#allocation2 + $0x8] sm:$0xff] %vm142, %v127
  %145 = vst.msk [vmem:[#allocation2 + $0x10] sm:$0xff] %vm142, %v128
  %146 = vst.msk [vmem:[#allocation2 + $0x18] sm:$0xff] %vm142, %v129
  %147 = vst.msk [vmem:[#allocation2 + $0x20] sm:$0xff] %vm142, %v130
  %148 = vst.msk [vmem:[#allocation2 + $0x28] sm:$0xff] %vm142, %v131
  %149 = vst.msk [vmem:[#allocation2 + $0x30] sm:$0xff] %vm142, %v132
  %150 = vst.msk [vmem:[#allocation2 + $0x38] sm:$0xff] %vm142, %v133
  %151 = vst.msk [vmem:[#allocation2 + $0x40] sm:$0xff] %vm142, %v134
  %152 = vst.msk [vmem:[#allocation2 + $0x48] sm:$0xff] %vm142, %v135
  %153 = vst.msk [vmem:[#allocation2 + $0x50] sm:$0xff] %vm142, %v136
  %154 = vst.msk [vmem:[#allocation2 + $0x58] sm:$0xff] %vm142, %v137
  %155 = vst.msk [vmem:[#allocation2 + $0x60] sm:$0xff] %vm142, %v138
  %156 = vst.msk [vmem:[#allocation2 + $0x68] sm:$0xff] %vm142, %v139
  %157 = vst.msk [vmem:[#allocation2 + $0x70] sm:$0xff] %vm142, %v140
  %158 = vst.msk [vmem:[#allocation2 + $0x78] sm:$0xff] %vm142, %v141
  %v159 = vld [vmem:[#allocation3] sm:$0xff]
  %v160 = vld [vmem:[#allocation3 + $0x8] sm:$0xff]
  %v161 = vld [vmem:[#allocation3 + $0x10] sm:$0xff]
  %v162 = vld [vmem:[#allocation3 + $0x18] sm:$0xff]
  %v163 = vld [vmem:[#allocation3 + $0x20] sm:$0xff]
  %v164 = vld [vmem:[#allocation3 + $0x28] sm:$0xff]
  %v165 = vld [vmem:[#allocation3 + $0x30] sm:$0xff]
  %v166 = vld [vmem:[#allocation3 + $0x38] sm:$0xff]
  %v167 = vld [vmem:[#allocation3 + $0x40] sm:$0xff]
  %v168 = vld [vmem:[#allocation3 + $0x48] sm:$0xff]
  %v169 = vld [vmem:[#allocation3 + $0x50] sm:$0xff]
  %v170 = vld [vmem:[#allocation3 + $0x58] sm:$0xff]
  %v171 = vld [vmem:[#allocation3 + $0x60] sm:$0xff]
  %v172 = vld [vmem:[#allocation3 + $0x68] sm:$0xff]
  %v173 = vld [vmem:[#allocation3 + $0x70] sm:$0xff]
  %v174 = vld [vmem:[#allocation3 + $0x78] sm:$0xff]
  %v175 = vmul.f32 %v45, %v45
  %v176 = vmul.f32 %v46, %v46
  %v177 = vmul.f32 %v47, %v47
  %v178 = vmul.f32 %v48, %v48
  %v179 = vmul.f32 %v49, %v49
  %v180 = vmul.f32 %v50, %v50
  %v181 = vmul.f32 %v51, %v51
  %v182 = vmul.f32 %v52, %v52
  %v183 = vmul.f32 %v53, %v53
  %v184 = vmul.f32 %v54, %v54
  %v185 = vmul.f32 %v55, %v55
  %v186 = vmul.f32 %v56, %v56
  %v187 = vmul.f32 %v57, %v57
  %v188 = vmul.f32 %v58, %v58
  %v189 = vmul.f32 %v59, %v59
  %v190 = vmul.f32 %v60, %v60
  %v191 = vsel %vm77, %v175, 0.0
  %192 = vadd.xlane.f32.xlu0 %v191
  %v193 = vpop.xlane.xlu0 %192
  %v194 = vsel %vm77, %v176, 0.0
  %195 = vadd.xlane.f32.xlu0 %v194
  %v196 = vpop.xlane.xlu0 %195
  %v197 = vsel %vm77, %v177, 0.0
  %198 = vadd.xlane.f32.xlu0 %v197
  %v199 = vpop.xlane.xlu0 %198
  %v200 = vsel %vm77, %v178, 0.0
  %201 = vadd.xlane.f32.xlu0 %v200
  %v202 = vpop.xlane.xlu0 %201
  %v203 = vsel %vm77, %v179, 0.0
  %204 = vadd.xlane.f32.xlu0 %v203
  %v205 = vpop.xlane.xlu0 %204
  %v206 = vsel %vm77, %v180, 0.0
  %207 = vadd.xlane.f32.xlu0 %v206
  %v208 = vpop.xlane.xlu0 %207
  %v209 = vsel %vm77, %v181, 0.0
  %210 = vadd.xlane.f32.xlu0 %v209
  %v211 = vpop.xlane.xlu0 %210
  %v212 = vsel %vm77, %v182, 0.0
  %213 = vadd.xlane.f32.xlu0 %v212
  %v214 = vpop.xlane.xlu0 %213
  %v215 = vsel %vm77, %v183, 0.0
  %216 = vadd.xlane.f32.xlu0 %v215
  %v217 = vpop.xlane.xlu0 %216
  %v218 = vsel %vm77, %v184, 0.0
  %219 = vadd.xlane.f32.xlu0 %v218
  %v220 = vpop.xlane.xlu0 %219
  %v221 = vsel %vm77, %v185, 0.0
  %222 = vadd.xlane.f32.xlu0 %v221
  %v223 = vpop.xlane.xlu0 %222
  %v224 = vsel %vm77, %v186, 0.0
  %225 = vadd.xlane.f32.xlu0 %v224
  %v226 = vpop.xlane.xlu0 %225
  %v227 = vsel %vm77, %v187, 0.0
  %228 = vadd.xlane.f32.xlu0 %v227
  %v229 = vpop.xlane.xlu0 %228
  %v230 = vsel %vm77, %v188, 0.0
  %231 = vadd.xlane.f32.xlu0 %v230
  %v232 = vpop.xlane.xlu0 %231
  %v233 = vsel %vm77, %v189, 0.0
  %234 = vadd.xlane.f32.xlu0 %v233
  %v235 = vpop.xlane.xlu0 %234
  %v236 = vsel %vm77, %v190, 0.0
  %237 = vadd.xlane.f32.xlu0 %v236
  %v238 = vpop.xlane.xlu0 %237
  %v239 = vadd.f32 %v159, %v193
  %v240 = vadd.f32 %v160, %v196
  %v241 = vadd.f32 %v161, %v199
  %v242 = vadd.f32 %v162, %v202
  %v243 = vadd.f32 %v163, %v205
  %v244 = vadd.f32 %v164, %v208
  %v245 = vadd.f32 %v165, %v211
  %v246 = vadd.f32 %v166, %v214
  %v247 = vadd.f32 %v167, %v217
  %v248 = vadd.f32 %v168, %v220
  %v249 = vadd.f32 %v169, %v223
  %v250 = vadd.f32 %v170, %v226
  %v251 = vadd.f32 %v171, %v229
  %v252 = vadd.f32 %v172, %v232
  %v253 = vadd.f32 %v173, %v235
  %v254 = vadd.f32 %v174, %v238
  %255 = vst.msk [vmem:[#allocation3] sm:$0xff] %vm142, %v239
  %256 = vst.msk [vmem:[#allocation3 + $0x8] sm:$0xff] %vm142, %v240
  %257 = vst.msk [vmem:[#allocation3 + $0x10] sm:$0xff] %vm142, %v241
  %258 = vst.msk [vmem:[#allocation3 + $0x18] sm:$0xff] %vm142, %v242
  %259 = vst.msk [vmem:[#allocation3 + $0x20] sm:$0xff] %vm142, %v243
  %260 = vst.msk [vmem:[#allocation3 + $0x28] sm:$0xff] %vm142, %v244
  %261 = vst.msk [vmem:[#allocation3 + $0x30] sm:$0xff] %vm142, %v245
  %262 = vst.msk [vmem:[#allocation3 + $0x38] sm:$0xff] %vm142, %v246
  %263 = vst.msk [vmem:[#allocation3 + $0x40] sm:$0xff] %vm142, %v247
  %264 = vst.msk [vmem:[#allocation3 + $0x48] sm:$0xff] %vm142, %v248
  %265 = vst.msk [vmem:[#allocation3 + $0x50] sm:$0xff] %vm142, %v249
  %266 = vst.msk [vmem:[#allocation3 + $0x58] sm:$0xff] %vm142, %v250
  %267 = vst.msk [vmem:[#allocation3 + $0x60] sm:$0xff] %vm142, %v251
  %268 = vst.msk [vmem:[#allocation3 + $0x68] sm:$0xff] %vm142, %v252
  %269 = vst.msk [vmem:[#allocation3 + $0x70] sm:$0xff] %vm142, %v253
  %270 = vst.msk [vmem:[#allocation3 + $0x78] sm:$0xff] %vm142, %v254
  // Predicated region
  $region10: #{tpu_custom_call.1} parent=0 // pred_check
    %p271 = pneg %p8
  $region11: #{tpu_custom_call.1} parent=0 // pred_check_branch
    %273 = sbr.rel (%p271) target = $region13
  $region12: #{tpu_custom_call.1} parent=0 // pred_region
    %v274 = vld [vmem:[#allocation2] sm:$0xff]
    %v275 = vld [vmem:[#allocation2 + $0x8] sm:$0xff]
    %v276 = vld [vmem:[#allocation2 + $0x10] sm:$0xff]
    %v277 = vld [vmem:[#allocation2 + $0x18] sm:$0xff]
    %v278 = vld [vmem:[#allocation2 + $0x20] sm:$0xff]
    %v279 = vld [vmem:[#allocation2 + $0x28] sm:$0xff]
    %v280 = vld [vmem:[#allocation2 + $0x30] sm:$0xff]
    %v281 = vld [vmem:[#allocation2 + $0x38] sm:$0xff]
    %v282 = vld [vmem:[#allocation2 + $0x40] sm:$0xff]
    %v283 = vld [vmem:[#allocation2 + $0x48] sm:$0xff]
    %v284 = vld [vmem:[#allocation2 + $0x50] sm:$0xff]
    %v285 = vld [vmem:[#allocation2 + $0x58] sm:$0xff]
    %v286 = vld [vmem:[#allocation2 + $0x60] sm:$0xff]
    %v287 = vld [vmem:[#allocation2 + $0x68] sm:$0xff]
    %v288 = vld [vmem:[#allocation2 + $0x70] sm:$0xff]
    %v289 = vld [vmem:[#allocation2 + $0x78] sm:$0xff]
    %v290 = vmul.f32 %v274, 0.0625
    %v291 = vmul.f32 %v275, 0.0625
    %v292 = vmul.f32 %v276, 0.0625
    %v293 = vmul.f32 %v277, 0.0625
    %v294 = vmul.f32 %v278, 0.0625
    %v295 = vmul.f32 %v279, 0.0625
    %v296 = vmul.f32 %v280, 0.0625
    %v297 = vmul.f32 %v281, 0.0625
    %v298 = vmul.f32 %v282, 0.0625
    %v299 = vmul.f32 %v283, 0.0625
    %v300 = vmul.f32 %v284, 0.0625
    %v301 = vmul.f32 %v285, 0.0625
    %v302 = vmul.f32 %v286, 0.0625
    %v303 = vmul.f32 %v287, 0.0625
    %v304 = vmul.f32 %v288, 0.0625
    %v305 = vmul.f32 %v289, 0.0625
    %v306 = vld [vmem:[#allocation3] sm:$0xff]
    %v307 = vld [vmem:[#allocation3 + $0x8] sm:$0xff]
    %v308 = vld [vmem:[#allocation3 + $0x10] sm:$0xff]
    %v309 = vld [vmem:[#allocation3 + $0x18] sm:$0xff]
    %v310 = vld [vmem:[#allocation3 + $0x20] sm:$0xff]
    %v311 = vld [vmem:[#allocation3 + $0x28] sm:$0xff]
    %v312 = vld [vmem:[#allocation3 + $0x30] sm:$0xff]
    %v313 = vld [vmem:[#allocation3 + $0x38] sm:$0xff]
    %v314 = vld [vmem:[#allocation3 + $0x40] sm:$0xff]
    %v315 = vld [vmem:[#allocation3 + $0x48] sm:$0xff]
    %v316 = vld [vmem:[#allocation3 + $0x50] sm:$0xff]
    %v317 = vld [vmem:[#allocation3 + $0x58] sm:$0xff]
    %v318 = vld [vmem:[#allocation3 + $0x60] sm:$0xff]
    %v319 = vld [vmem:[#allocation3 + $0x68] sm:$0xff]
    %v320 = vld [vmem:[#allocation3 + $0x70] sm:$0xff]
    %v321 = vld [vmem:[#allocation3 + $0x78] sm:$0xff]
    %v322 = vmul.f32 %v274, %v290
    %v323 = vmul.f32 %v275, %v291
    %v324 = vmul.f32 %v276, %v292
    %v325 = vmul.f32 %v277, %v293
    %v326 = vmul.f32 %v278, %v294
    %v327 = vmul.f32 %v279, %v295
    %v328 = vmul.f32 %v280, %v296
    %v329 = vmul.f32 %v281, %v297
    %v330 = vmul.f32 %v282, %v298
    %v331 = vmul.f32 %v283, %v299
    %v332 = vmul.f32 %v284, %v300
    %v333 = vmul.f32 %v285, %v301
    %v334 = vmul.f32 %v286, %v302
    %v335 = vmul.f32 %v287, %v303
    %v336 = vmul.f32 %v288, %v304
    %v337 = vmul.f32 %v289, %v305
    %v338 = vsub.f32 %v306, %v322
    %v339 = vsub.f32 %v307, %v323
    %v340 = vsub.f32 %v308, %v324
    %v341 = vsub.f32 %v309, %v325
    %v342 = vsub.f32 %v310, %v326
    %v343 = vsub.f32 %v311, %v327
    %v344 = vsub.f32 %v312, %v328
    %v345 = vsub.f32 %v313, %v329
    %v346 = vsub.f32 %v314, %v330
    %v347 = vsub.f32 %v315, %v331
    %v348 = vsub.f32 %v316, %v332
    %v349 = vsub.f32 %v317, %v333
    %v350 = vsub.f32 %v318, %v334
    %v351 = vsub.f32 %v319, %v335
    %v352 = vsub.f32 %v320, %v336
    %v353 = vsub.f32 %v321, %v337
    %v354 = vmax.f32 %v338, 0.0
    %v355 = vmax.f32 %v339, 0.0
    %v356 = vmax.f32 %v340, 0.0
    %v357 = vmax.f32 %v341, 0.0
    %v358 = vmax.f32 %v342, 0.0
    %v359 = vmax.f32 %v343, 0.0
    %v360 = vmax.f32 %v344, 0.0
    %v361 = vmax.f32 %v345, 0.0
    %v362 = vmax.f32 %v346, 0.0
    %v363 = vmax.f32 %v347, 0.0
    %v364 = vmax.f32 %v348, 0.0
    %v365 = vmax.f32 %v349, 0.0
    %v366 = vmax.f32 %v350, 0.0
    %v367 = vmax.f32 %v351, 0.0
    %v368 = vmax.f32 %v352, 0.0
    %v369 = vmax.f32 %v353, 0.0
    %v370 = vrcp.pop 15.0
    %v371 = vmul.f32 %v354, %v370
    %v372 = vmul.f32 %v355, %v370
    %v373 = vmul.f32 %v356, %v370
    %v374 = vmul.f32 %v357, %v370
    %v375 = vmul.f32 %v358, %v370
    %v376 = vmul.f32 %v359, %v370
    %v377 = vmul.f32 %v360, %v370
    %v378 = vmul.f32 %v361, %v370
    %v379 = vmul.f32 %v362, %v370
    %v380 = vmul.f32 %v363, %v370
    %v381 = vmul.f32 %v364, %v370
    %v382 = vmul.f32 %v365, %v370
    %v383 = vmul.f32 %v366, %v370
    %v384 = vmul.f32 %v367, %v370
    %v385 = vmul.f32 %v368, %v370
    %v386 = vmul.f32 %v369, %v370
    %v387 = vrsqrt.pop %v371
    %v388 = vmul.f32 %v371, %v387
    %vm389 = vcmp.eq.f32.partialorder %v371, inf
    %v390 = vsel %vm389, %v371, %v388
    %vm391 = vcmp.eq.f32.partialorder %v371, 0.0
    %v392 = vand.u32 %v371, 2147483648
    %v393 = vsel %vm391, %v392, %v390
    %v394 = vrsqrt.pop %v372
    %v395 = vmul.f32 %v372, %v394
    %vm396 = vcmp.eq.f32.partialorder %v372, inf
    %v397 = vsel %vm396, %v372, %v395
    %vm398 = vcmp.eq.f32.partialorder %v372, 0.0
    %v399 = vand.u32 %v372, 2147483648
    %v400 = vsel %vm398, %v399, %v397
    %v401 = vrsqrt.pop %v373
    %v402 = vmul.f32 %v373, %v401
    %vm403 = vcmp.eq.f32.partialorder %v373, inf
    %v404 = vsel %vm403, %v373, %v402
    %vm405 = vcmp.eq.f32.partialorder %v373, 0.0
    %v406 = vand.u32 %v373, 2147483648
    %v407 = vsel %vm405, %v406, %v404
    %v408 = vrsqrt.pop %v374
    %v409 = vmul.f32 %v374, %v408
    %vm410 = vcmp.eq.f32.partialorder %v374, inf
    %v411 = vsel %vm410, %v374, %v409
    %vm412 = vcmp.eq.f32.partialorder %v374, 0.0
    %v413 = vand.u32 %v374, 2147483648
    %v414 = vsel %vm412, %v413, %v411
    %v415 = vrsqrt.pop %v375
    %v416 = vmul.f32 %v375, %v415
    %vm417 = vcmp.eq.f32.partialorder %v375, inf
    %v418 = vsel %vm417, %v375, %v416
    %vm419 = vcmp.eq.f32.partialorder %v375, 0.0
    %v420 = vand.u32 %v375, 2147483648
    %v421 = vsel %vm419, %v420, %v418
    %v422 = vrsqrt.pop %v376
    %v423 = vmul.f32 %v376, %v422
    %vm424 = vcmp.eq.f32.partialorder %v376, inf
    %v425 = vsel %vm424, %v376, %v423
    %vm426 = vcmp.eq.f32.partialorder %v376, 0.0
    %v427 = vand.u32 %v376, 2147483648
    %v428 = vsel %vm426, %v427, %v425
    %v429 = vrsqrt.pop %v377
    %v430 = vmul.f32 %v377, %v429
    %vm431 = vcmp.eq.f32.partialorder %v377, inf
    %v432 = vsel %vm431, %v377, %v430
    %vm433 = vcmp.eq.f32.partialorder %v377, 0.0
    %v434 = vand.u32 %v377, 2147483648
    %v435 = vsel %vm433, %v434, %v432
    %v436 = vrsqrt.pop %v378
    %v437 = vmul.f32 %v378, %v436
    %vm438 = vcmp.eq.f32.partialorder %v378, inf
    %v439 = vsel %vm438, %v378, %v437
    %vm440 = vcmp.eq.f32.partialorder %v378, 0.0
    %v441 = vand.u32 %v378, 2147483648
    %v442 = vsel %vm440, %v441, %v439
    %v443 = vrsqrt.pop %v379
    %v444 = vmul.f32 %v379, %v443
    %vm445 = vcmp.eq.f32.partialorder %v379, inf
    %v446 = vsel %vm445, %v379, %v444
    %vm447 = vcmp.eq.f32.partialorder %v379, 0.0
    %v448 = vand.u32 %v379, 2147483648
    %v449 = vsel %vm447, %v448, %v446
    %v450 = vrsqrt.pop %v380
    %v451 = vmul.f32 %v380, %v450
    %vm452 = vcmp.eq.f32.partialorder %v380, inf
    %v453 = vsel %vm452, %v380, %v451
    %vm454 = vcmp.eq.f32.partialorder %v380, 0.0
    %v455 = vand.u32 %v380, 2147483648
    %v456 = vsel %vm454, %v455, %v453
    %v457 = vrsqrt.pop %v381
    %v458 = vmul.f32 %v381, %v457
    %vm459 = vcmp.eq.f32.partialorder %v381, inf
    %v460 = vsel %vm459, %v381, %v458
    %vm461 = vcmp.eq.f32.partialorder %v381, 0.0
    %v462 = vand.u32 %v381, 2147483648
    %v463 = vsel %vm461, %v462, %v460
    %v464 = vrsqrt.pop %v382
    %v465 = vmul.f32 %v382, %v464
    %vm466 = vcmp.eq.f32.partialorder %v382, inf
    %v467 = vsel %vm466, %v382, %v465
    %vm468 = vcmp.eq.f32.partialorder %v382, 0.0
    %v469 = vand.u32 %v382, 2147483648
    %v470 = vsel %vm468, %v469, %v467
    %v471 = vrsqrt.pop %v383
    %v472 = vmul.f32 %v383, %v471
    %vm473 = vcmp.eq.f32.partialorder %v383, inf
    %v474 = vsel %vm473, %v383, %v472
    %vm475 = vcmp.eq.f32.partialorder %v383, 0.0
    %v476 = vand.u32 %v383, 2147483648
    %v477 = vsel %vm475, %v476, %v474
    %v478 = vrsqrt.pop %v384
    %v479 = vmul.f32 %v384, %v478
    %vm480 = vcmp.eq.f32.partialorder %v384, inf
    %v481 = vsel %vm480, %v384, %v479
    %vm482 = vcmp.eq.f32.partialorder %v384, 0.0
    %v483 = vand.u32 %v384, 2147483648
    %v484 = vsel %vm482, %v483, %v481
    %v485 = vrsqrt.pop %v385
    %v486 = vmul.f32 %v385, %v485
    %vm487 = vcmp.eq.f32.partialorder %v385, inf
    %v488 = vsel %vm487, %v385, %v486
    %vm489 = vcmp.eq.f32.partialorder %v385, 0.0
    %v490 = vand.u32 %v385, 2147483648
    %v491 = vsel %vm489, %v490, %v488
    %v492 = vrsqrt.pop %v386
    %v493 = vmul.f32 %v386, %v492
    %vm494 = vcmp.eq.f32.partialorder %v386, inf
    %v495 = vsel %vm494, %v386, %v493
    %vm496 = vcmp.eq.f32.partialorder %v386, 0.0
    %v497 = vand.u32 %v386, 2147483648
    %v498 = vsel %vm496, %v497, %v495
    %499 = vst.msk [vmem:[%s1] sm:$0xff] %vm142, %v290
    %500 = vst.msk [vmem:[%s1 + $0x8] sm:$0xff] %vm142, %v291
    %501 = vst.msk [vmem:[%s1 + $0x10] sm:$0xff] %vm142, %v292
    %502 = vst.msk [vmem:[%s1 + $0x18] sm:$0xff] %vm142, %v293
    %503 = vst.msk [vmem:[%s1 + $0x20] sm:$0xff] %vm142, %v294
    %504 = vst.msk [vmem:[%s1 + $0x28] sm:$0xff] %vm142, %v295
    %505 = vst.msk [vmem:[%s1 + $0x30] sm:$0xff] %vm142, %v296
    %506 = vst.msk [vmem:[%s1 + $0x38] sm:$0xff] %vm142, %v297
    %507 = vst.msk [vmem:[%s1 + $0x40] sm:$0xff] %vm142, %v298
    %508 = vst.msk [vmem:[%s1 + $0x48] sm:$0xff] %vm142, %v299
    %509 = vst.msk [vmem:[%s1 + $0x50] sm:$0xff] %vm142, %v300
    %510 = vst.msk [vmem:[%s1 + $0x58] sm:$0xff] %vm142, %v301
    %511 = vst.msk [vmem:[%s1 + $0x60] sm:$0xff] %vm142, %v302
    %512 = vst.msk [vmem:[%s1 + $0x68] sm:$0xff] %vm142, %v303
    %513 = vst.msk [vmem:[%s1 + $0x70] sm:$0xff] %vm142, %v304
    %514 = vst.msk [vmem:[%s1 + $0x78] sm:$0xff] %vm142, %v305
    %531 = vrot.lane.b32.xlu0 %v393, 1
    %v532 = vpop.permute.xlu0 %531
    %533 = vrot.lane.b32.xlu0 %v400, 1
    %v534 = vpop.permute.xlu0 %533
    %535 = vrot.lane.b32.xlu0 %v407, 1
    %v536 = vpop.permute.xlu0 %535
    %537 = vrot.lane.b32.xlu0 %v414, 1
    %v538 = vpop.permute.xlu0 %537
    %539 = vrot.lane.b32.xlu0 %v421, 1
    %v540 = vpop.permute.xlu0 %539
    %541 = vrot.lane.b32.xlu0 %v428, 1
    %v542 = vpop.permute.xlu0 %541
    %543 = vrot.lane.b32.xlu0 %v435, 1
    %v544 = vpop.permute.xlu0 %543
    %545 = vrot.lane.b32.xlu0 %v442, 1
    %v546 = vpop.permute.xlu0 %545
    %547 = vrot.lane.b32.xlu0 %v449, 1
    %v548 = vpop.permute.xlu0 %547
    %549 = vrot.lane.b32.xlu0 %v456, 1
    %v550 = vpop.permute.xlu0 %549
    %551 = vrot.lane.b32.xlu0 %v463, 1
    %v552 = vpop.permute.xlu0 %551
    %553 = vrot.lane.b32.xlu0 %v470, 1
    %v554 = vpop.permute.xlu0 %553
    %555 = vrot.lane.b32.xlu0 %v477, 1
    %v556 = vpop.permute.xlu0 %555
    %557 = vrot.lane.b32.xlu0 %v484, 1
    %v558 = vpop.permute.xlu0 %557
    %559 = vrot.lane.b32.xlu0 %v491, 1
    %v560 = vpop.permute.xlu0 %559
    %561 = vrot.lane.b32.xlu0 %v498, 1
    %v562 = vpop.permute.xlu0 %561
    %vm579 = vcmask 15368
    %580 = vst.msk [vmem:[%s1] sm:$0xff] %vm579, %v532
    %581 = vst.msk [vmem:[%s1 + $0x8] sm:$0xff] %vm579, %v534
    %582 = vst.msk [vmem:[%s1 + $0x10] sm:$0xff] %vm579, %v536
    %583 = vst.msk [vmem:[%s1 + $0x18] sm:$0xff] %vm579, %v538
    %584 = vst.msk [vmem:[%s1 + $0x20] sm:$0xff] %vm579, %v540
    %585 = vst.msk [vmem:[%s1 + $0x28] sm:$0xff] %vm579, %v542
    %586 = vst.msk [vmem:[%s1 + $0x30] sm:$0xff] %vm579, %v544
    %587 = vst.msk [vmem:[%s1 + $0x38] sm:$0xff] %vm579, %v546
    %588 = vst.msk [vmem:[%s1 + $0x40] sm:$0xff] %vm579, %v548
    %589 = vst.msk [vmem:[%s1 + $0x48] sm:$0xff] %vm579, %v550
    %590 = vst.msk [vmem:[%s1 + $0x50] sm:$0xff] %vm579, %v552
    %591 = vst.msk [vmem:[%s1 + $0x58] sm:$0xff] %vm579, %v554
    %592 = vst.msk [vmem:[%s1 + $0x60] sm:$0xff] %vm579, %v556
    %593 = vst.msk [vmem:[%s1 + $0x68] sm:$0xff] %vm579, %v558
    %594 = vst.msk [vmem:[%s1 + $0x70] sm:$0xff] %vm579, %v560
    %595 = vst.msk [vmem:[%s1 + $0x78] sm:$0xff] %vm579, %v562
  $region13: #{tpu_custom_call.1} parent=0 // pred_fallthru
    _
  // Predicated region
  $region14: #{tpu_custom_call.1} parent=0 // pred_check
    _
  $region15: #{tpu_custom_call.1} parent=0 // pred_check_branch
    %597 = sbr.rel (0) target = $region17
  $region16: #{tpu_custom_call.1} parent=0 // pred_region
    _
  $region17: #{tpu_custom_call.1} parent=0 // pred_fallthru
    _
  // Predicated region
  $region18: #{tpu_custom_call.1} parent=0 // pred_check
    _
  $region19: #{tpu_custom_call.1} parent=0 // pred_check_branch
    %599 = sbr.rel (0) target = $region21
  $region20: #{tpu_custom_call.1} parent=0 // pred_region
    _
  $region21: #{tpu_custom_call.1} parent=0 // pred_fallthru
    _

</llo_original>
